<compile_context>
chip_gen: v6e
topology: v6e:2x2x1
jax: 0.10.0
libtpu: 0.0.40
codegen_flags: <defaults>
</compile_context>

<pallas_src>
import jax
import jax.numpy as jnp
from jax.experimental import pallas as pl
from jax.experimental.pallas import tpu as pltpu


def classifier_head_kernel(cls_ref, w1_ref, b1_ref, w2_ref, b2_ref, out_ref):
    # cls_ref: [tb, H]    w1_ref: [H, H2]     b1_ref: [1, H2]  (f32)
    # w2_ref:  [H2, Cp]   b2_ref: [1, Cp] f32  out_ref: [tb, Cp] (f32)

    # pooler FCLayer (use_activation=True): tanh first, then linear.
    x = jnp.tanh(cls_ref[...].astype(jnp.float32))
    x = x.astype(w1_ref.dtype)                      # bf16-in / f32-accumulate on MXU
    h = jnp.dot(x, w1_ref[...], preferred_element_type=jnp.float32) + b1_ref[...]

    # classifier FCLayer (use_activation=False): linear only.
    h = h.astype(w2_ref.dtype)
    o = jnp.dot(h, w2_ref[...], preferred_element_type=jnp.float32) + b2_ref[...]

    out_ref[...] = o.astype(out_ref.dtype)


def roberta_classifier_head(hidden_states, w1, b1, w2, b2, *, block_b=128):
    """hidden_states: [B, S, H]; w1: [H, H2]; w2: [H2, C]; returns f32 logits [B, C]."""
    B, S, H = hidden_states.shape
    H2 = w1.shape[1]
    C = w2.shape[1]

    # Only the CLS row is needed downstream — slice before the kernel so the
    # [B, S, H] tensor is never DMA'd into VMEM.
    cls = hidden_states[:, 0, :]                    # [B, H]

    # Lane-dense output: pad tiny class dim up to a full 128-lane slab.
    c_pad = max(128, ((C + 127) // 128) * 128)
    w2p = jnp.pad(w2, ((0, 0), (0, c_pad - C)))
    b2p = jnp.pad(b2.astype(jnp.float32).reshape(1, C), ((0, 0), (0, c_pad - C)))
    b1p = b1.astype(jnp.float32).reshape(1, H2)

    # Pad batch to a sublane multiple and tile it over a parallel grid.
    tb = min(block_b, ((B + 7) // 8) * 8)
    n_blocks = pl.cdiv(B, tb)
    b_pad = n_blocks * tb
    if b_pad != B:
        cls = jnp.pad(cls, ((0, b_pad - B), (0, 0)))

    itemsize = lambda a: a.size * a.dtype.itemsize
    cost = pl.CostEstimate(
        flops=2 * b_pad * H * H2 + 2 * b_pad * H2 * c_pad,
        transcendentals=b_pad * H,
        bytes_accessed=(itemsize(cls) + itemsize(w1) + itemsize(b1p)
                        + itemsize(w2p) + itemsize(b2p) + b_pad * c_pad * 4),
    )

    out = pl.pallas_call(
        classifier_head_kernel,
        out_shape=jax.ShapeDtypeStruct((b_pad, c_pad), jnp.float32),
        grid_spec=pltpu.PrefetchScalarGridSpec(
            num_scalar_prefetch=0,
            grid=(n_blocks,),
            in_specs=[
                pl.BlockSpec((tb, H), lambda i: (i, 0)),        # CLS tile (pipelined)
                pl.BlockSpec((H, H2), lambda i: (0, 0)),        # grid-invariant weights
                pl.BlockSpec((1, H2), lambda i: (0, 0)),
                pl.BlockSpec((H2, c_pad), lambda i: (0, 0)),
                pl.BlockSpec((1, c_pad), lambda i: (0, 0)),
            ],
            out_specs=pl.BlockSpec((tb, c_pad), lambda i: (i, 0)),
        ),
        compiler_params=pltpu.CompilerParams(
            dimension_semantics=("parallel",)),
        cost_estimate=cost,
    )(cls, w1, b1p, w2p, b2p)

    return out[:B, :C]


def xavier_uniform(key, fan_in, fan_out, dtype=jnp.float32):
    # Matches torch.nn.init.xavier_uniform_ for a [fan_out, fan_in] weight,
    # stored here pre-transposed as [in, out].
    limit = jnp.sqrt(6.0 / (fan_in + fan_out))
    return jax.random.uniform(key, (fan_in, fan_out), dtype=dtype,
                              minval=-limit, maxval=limit)


if __name__ == "__main__":
    # Small shapes consistent with the module: hidden_size=32 (stand-in for
    # 1024), hidden_size//2=16, num_classes=3, batch=2, seq=8.
    B, S, H, C = 2, 8, 32, 3
    H2 = H // 2

    key = jax.random.PRNGKey(0)
    k_hs, k_w1, k_b1, k_w2, k_b2 = jax.random.split(key, 5)

    # Stand-in for roberta(input_ids, attention_mask)[0] -> [B, S, H]
    hidden_states = jax.random.normal(k_hs, (B, S, H),
                                      dtype=jnp.float32).astype(jnp.bfloat16)

    # pooler: Linear(H, H2) — bf16 weights (MXU-native), f32 bias
    w1 = xavier_uniform(k_w1, H, H2).astype(jnp.bfloat16)
    b1 = (jax.random.uniform(k_b1, (H2,), minval=-1.0, maxval=1.0)
          / jnp.sqrt(jnp.float32(H))).astype(jnp.float32)
    # classifier: Linear(H2, C)
    w2 = xavier_uniform(k_w2, H2, C).astype(jnp.bfloat16)
    b2 = (jax.random.uniform(k_b2, (C,), minval=-1.0, maxval=1.0)
          / jnp.sqrt(jnp.float32(H2))).astype(jnp.float32)

    logits = roberta_classifier_head(hidden_states, w1, b1, w2, b2)
    logits = jax.block_until_ready(logits)

    # Matched-precision pure-JAX reference (same bf16-in / f32-acc ladder).
    cls = hidden_states[:, 0, :]
    x = jnp.tanh(cls.astype(jnp.float32)).astype(jnp.bfloat16)
    ref = jnp.dot(x, w1, preferred_element_type=jnp.float32) + b1[None, :]
    ref = jnp.dot(ref.astype(jnp.bfloat16), w2,
                  preferred_element_type=jnp.float32) + b2[None, :]

    assert logits.shape == (B, C), logits.shape
    assert jnp.allclose(logits, ref, atol=1e-2, rtol=1e-2), (logits, ref)

    print("KERNEL_OK")
</pallas_src>

<mosaic_0001>
module attributes {stable_mosaic.version = 11 : i64} {
  func.func @classifier_head_kernel(%arg0: i32, %arg1: memref<8x32xbf16, #tpu.memory_space<vmem>>, %arg2: memref<32x16xbf16, #tpu.memory_space<vmem>>, %arg3: memref<1x16xf32, #tpu.memory_space<vmem>>, %arg4: memref<16x128xbf16, #tpu.memory_space<vmem>>, %arg5: memref<1x128xf32, #tpu.memory_space<vmem>>, %arg6: memref<8x128xf32, #tpu.memory_space<vmem>>) attributes {dimension_semantics = [#tpu.dimension_semantics<parallel>], iteration_bounds = array<i64: 1>, scalar_prefetch = 0 : i64, scratch_operands = 0 : i64, tpu.core_type = #tpu.core_type<tc>, window_params = [{transform_indices = @transform_0, window_bounds = array<i64: 8, 32>}, {pipeline_mode = #tpu.pipeline_mode<synchronous>, transform_indices = @transform_1, window_bounds = array<i64: 32, 16>}, {pipeline_mode = #tpu.pipeline_mode<synchronous>, transform_indices = @transform_2, window_bounds = array<i64: 1, 16>}, {pipeline_mode = #tpu.pipeline_mode<synchronous>, transform_indices = @transform_3, window_bounds = array<i64: 16, 128>}, {pipeline_mode = #tpu.pipeline_mode<synchronous>, transform_indices = @transform_4, window_bounds = array<i64: 1, 128>}, {transform_indices = @transform_5, window_bounds = array<i64: 8, 128>}]} {
    %c0 = arith.constant 0 : index
    %c0_0 = arith.constant 0 : index
    %0 = vector.load %arg1[%c0, %c0_0] : memref<8x32xbf16, #tpu.memory_space<vmem>>, vector<8x32xbf16>
    %1 = arith.extf %0 : vector<8x32xbf16> to vector<8x32xf32>
    %2 = math.tanh %1 : vector<8x32xf32>
    %3 = arith.truncf %2 : vector<8x32xf32> to vector<8x32xbf16>
    %c0_1 = arith.constant 0 : index
    %c0_2 = arith.constant 0 : index
    %4 = vector.load %arg2[%c0_1, %c0_2] : memref<32x16xbf16, #tpu.memory_space<vmem>>, vector<32x16xbf16>
    %cst = arith.constant dense<0.000000e+00> : vector<8x16xf32>
    %5 = tpu.matmul %3, %4, %cst {dimension_numbers = #tpu.dot_dimension_numbers<[1], [0], [0], [1], [0, 0, 1, 1], [], []>} : vector<8x32xbf16>, vector<32x16xbf16>, vector<8x16xf32> -> vector<8x16xf32>
    %c0_3 = arith.constant 0 : index
    %c0_4 = arith.constant 0 : index
    %6 = vector.load %arg3[%c0_3, %c0_4] : memref<1x16xf32, #tpu.memory_space<vmem>>, vector<1x16xf32>
    %7 = vector.broadcast %6 : vector<1x16xf32> to vector<8x16xf32>
    %8 = arith.addf %5, %7 : vector<8x16xf32>
    %9 = arith.truncf %8 : vector<8x16xf32> to vector<8x16xbf16>
    %c0_5 = arith.constant 0 : index
    %c0_6 = arith.constant 0 : index
    %10 = vector.load %arg4[%c0_5, %c0_6] : memref<16x128xbf16, #tpu.memory_space<vmem>>, vector<16x128xbf16>
    %cst_7 = arith.constant dense<0.000000e+00> : vector<8x128xf32>
    %11 = tpu.matmul %9, %10, %cst_7 {dimension_numbers = #tpu.dot_dimension_numbers<[1], [0], [0], [1], [0, 0, 1, 1], [], []>} : vector<8x16xbf16>, vector<16x128xbf16>, vector<8x128xf32> -> vector<8x128xf32>
    %c0_8 = arith.constant 0 : index
    %c0_9 = arith.constant 0 : index
    %12 = vector.load %arg5[%c0_8, %c0_9] : memref<1x128xf32, #tpu.memory_space<vmem>>, vector<1x128xf32>
    %13 = vector.broadcast %12 : vector<1x128xf32> to vector<8x128xf32>
    %14 = arith.addf %11, %13 : vector<8x128xf32>
    %c0_10 = arith.constant 0 : index
    %c0_11 = arith.constant 0 : index
    %15 = vector.load %arg6[%c0_10, %c0_11] : memref<8x128xf32, #tpu.memory_space<vmem>>, vector<8x128xf32>
    tpu.vector_store %arg6[%c0_10, %c0_11], %14 {strides = array<i32>} : memref<8x128xf32, #tpu.memory_space<vmem>>, vector<8x128xf32>,
    return
  }
  func.func @transform_0(%arg0: i32) -> (i32, i32) {
    %c0_i32 = arith.constant 0 : i32
    %c0_i32_0 = arith.constant 0 : i32
    return %arg0, %c0_i32 : i32, i32
  }
  func.func @transform_1(%arg0: i32) -> (i32, i32) {
    %c0_i32 = arith.constant 0 : i32
    %c0_i32_0 = arith.constant 0 : i32
    %c0_i32_1 = arith.constant 0 : i32
    return %c0_i32, %c0_i32_0 : i32, i32
  }
  func.func @transform_2(%arg0: i32) -> (i32, i32) {
    %c0_i32 = arith.constant 0 : i32
    %c0_i32_0 = arith.constant 0 : i32
    %c0_i32_1 = arith.constant 0 : i32
    return %c0_i32, %c0_i32_0 : i32, i32
  }
  func.func @transform_3(%arg0: i32) -> (i32, i32) {
    %c0_i32 = arith.constant 0 : i32
    %c0_i32_0 = arith.constant 0 : i32
    %c0_i32_1 = arith.constant 0 : i32
    return %c0_i32, %c0_i32_0 : i32, i32
  }
  func.func @transform_4(%arg0: i32) -> (i32, i32) {
    %c0_i32 = arith.constant 0 : i32
    %c0_i32_0 = arith.constant 0 : i32
    %c0_i32_1 = arith.constant 0 : i32
    return %c0_i32, %c0_i32_0 : i32, i32
  }
  func.func @transform_5(%arg0: i32) -> (i32, i32) {
    %c0_i32 = arith.constant 0 : i32
    %c0_i32_0 = arith.constant 0 : i32
    return %arg0, %c0_i32 : i32, i32
  }
}

</mosaic_0001>

<llo_original>
// kernel: tpu_custom_call.1
$region0: #{tpu_custom_call.1}
  #allocation0 [shape = 'u32[]', space=smem, size = 0x4, offset = 0x4, fixed_abs, tag = 'smem constant byte address 0x4 - core index']
  #allocation1 [shape = 'u32[144,128]{1,0:T(1,128)}', space=vmem, size = 0x12000, scoped, tag = 'internal scratch']
  %s0 = inlined_call_operand.vmem [shape: bf16[8,32], index: 0, kind: input, shape index: {}]
  %s1 = inlined_call_operand.vmem [shape: bf16[32,16], index: 1, kind: input, shape index: {}]
  %s2 = inlined_call_operand.vmem [shape: f32[1,16], index: 2, kind: input, shape index: {}]
  %s3 = inlined_call_operand.vmem [shape: bf16[16,128], index: 3, kind: input, shape index: {}]
  %s4 = inlined_call_operand.vmem [shape: f32[1,128], index: 4, kind: input, shape index: {}]
  %s5 = inlined_call_operand.hbm [shape: f32[8,128], index: 5, kind: output, shape index: {}]
  %s6 = sld [smem:[#allocation0]]
  $region30: #{tpu_custom_call.1} parent=0
    _
  %s8 = ssub.s32 1, %s6
  %s9 = scalar_select 0, %s8, %s6
  $region1: #{tpu_custom_call.1} parent=0
    #allocation2 [shape = 'u8[4096]{0}', space=vmem, size = 0x1000, scoped, tag = 'output window, operand 0, single buffered']
    #allocation3 [shape = 's32[1]{0}', space=sflag, size = 0x4, scoped, tag = 'scoped memory for tpu_custom_call.1']
    %10 = vsyncpa [#allocation3], 0
    // Predicated region
    $region2: #{tpu_custom_call.1} parent=1 // pred_check
      _
    $region3: #{tpu_custom_call.1} parent=1 // pred_check_branch
      %12 = sbr.rel (0) target = $region5
    $region4: #{tpu_custom_call.1} parent=1 // pred_region
      _
    $region5: #{tpu_custom_call.1} parent=1 // pred_fallthru
      _
    // Predicated region
    $region6: #{tpu_custom_call.1} parent=1 // pred_check
      _
    $region7: #{tpu_custom_call.1} parent=1 // pred_check_branch
      %14 = sbr.rel (0) target = $region9
    $region8: #{tpu_custom_call.1} parent=1 // pred_region
      _
    $region9: #{tpu_custom_call.1} parent=1 // pred_fallthru
      _
    // Predicated region
    $region10: #{tpu_custom_call.1} parent=1 // pred_check
      _
    $region11: #{tpu_custom_call.1} parent=1 // pred_check_branch
      %16 = sbr.rel (0) target = $region13
    $region12: #{tpu_custom_call.1} parent=1 // pred_region
      _
    $region13: #{tpu_custom_call.1} parent=1 // pred_fallthru
      _
    // Predicated region
    $region14: #{tpu_custom_call.1} parent=1 // pred_check
      _
    $region15: #{tpu_custom_call.1} parent=1 // pred_check_branch
      %18 = sbr.rel (0) target = $region17
    $region16: #{tpu_custom_call.1} parent=1 // pred_region
      _
    $region17: #{tpu_custom_call.1} parent=1 // pred_fallthru
      _
    // Predicated region
    $region18: #{tpu_custom_call.1} parent=1 // pred_check
      _
    $region19: #{tpu_custom_call.1} parent=1 // pred_check_branch
      %20 = sbr.rel (0) target = $region21
    $region20: #{tpu_custom_call.1} parent=1 // pred_region
      _
    $region21: #{tpu_custom_call.1} parent=1 // pred_fallthru
      _
    %v22 = vld [vmem:[%s0] sm:$0xf]
    %v23 = vunpack.c.l.bf16 %v22
    %v24 = vtanh.pop %v23
    %v25 = vpack.c.bf16 %v24, %v24
    %v26 = vld [vmem:[%s1] sm:$0xf]
    %v27 = vld [vmem:[%s1 + $0x4] sm:$0xf]
    %v28 = vld [vmem:[%s1 + $0x8] sm:$0xf]
    %v29 = vld [vmem:[%s1 + $0xc] sm:$0xf]
    %v30 = vld [vmem:[%s2] sm:$0x1]
    %v32 = vlaneseq
    %v33 = vshrl.u32 %v32, 7
    %v34 = vsub.s32 0, %v33
    %v35 = vrot.slane %v30, %v34
    %v41 = vunpack.c.l.b16 %v26
    %v42 = vunpack.c.l.b16 %v27
    %v43 = vunpack.c.l.b16 %v28
    %v44 = vunpack.c.l.b16 %v29
    %v45 = vpack.c.b16 %v42, %v41
    %v46 = vpack.c.b16 %v44, %v43
    %vm49 = vcmask 261120
    %v51 = vsel %vm49, %v25, 0
    %53 = vmatprep.subr.bf16.mxu0 0
    %54 = vmatpush1.bf16.msra.mxu0 0
    %55 = vmatprep.subr.bf16.mxu0 0
    %56 = vmatpush1.bf16.msra.mxu0 0
    %57 = vmatprep.subr.bf16.mxu0 0
    %58 = vmatpush1.bf16.msra.mxu0 0
    %59 = vmatprep.subr.bf16.mxu0 0
    %60 = vmatpush1.bf16.msra.mxu0 0
    %61 = vmatprep.subr.bf16.mxu0 0
    %62 = vmatpush1.bf16.msra.mxu0 0
    %63 = vmatprep.subr.bf16.mxu0 0
    %64 = vmatpush1.bf16.msra.mxu0 0
    %65 = vmatprep.subr.bf16.mxu0 0
    %66 = vmatpush1.bf16.msra.mxu0 %v46
    %67 = vmatprep.subr.bf16.mxu0 0
    %68 = vmatpush1.bf16.msra.mxu0 %v45
    %69 = vmatprep.subr.bf16.mxu0 0
    %70 = vmatpush2.bf16.msra.mxu0 0
    %71 = vmatprep.subr.bf16.mxu0 0
    %72 = vmatpush2.bf16.msra.mxu0 0
    %73 = vmatprep.subr.bf16.mxu0 0
    %74 = vmatpush2.bf16.msra.mxu0 0
    %75 = vmatprep.subr.bf16.mxu0 0
    %76 = vmatpush2.bf16.msra.mxu0 0
    %77 = vmatprep.subr.bf16.mxu0 0
    %78 = vmatpush2.bf16.msra.mxu0 0
    %79 = vmatprep.subr.bf16.mxu0 0
    %80 = vmatpush2.bf16.msra.mxu0 0
    %81 = vmatprep.subr.bf16.mxu0 0
    %82 = vmatpush2.bf16.msra.mxu0 0
    %83 = vmatprep.subr.bf16.mxu0 0
    %84 = vmatpush2.bf16.msra.mxu0 0
    %85 = vmatprep.mubr.bf16.mxu0 0
    %86 = vmatmul.mubr.bf16.gmra.mxu0 %v51
    %v87 = vpop.f32.mrf.mxu0
    %v88 = vadd.f32 %v35, %v87
    %v89 = vpop.f32.mrf.mxu0
    %v90 = vpop.f32.mrf.mxu0
    %v91 = vpop.f32.mrf.mxu0
    %92 = vdwg.mxu0
    %v93 = vpack.c.bf16 %v88, %v88
    %v94 = vld [vmem:[%s3] sm:$0xf]
    %v95 = vld [vmem:[%s3 + $0x4] sm:$0xf]
    %v96 = vld [vmem:[%s4] sm:$0x1]
    %v98 = vlaneseq
    %v99 = vshrl.u32 %v98, 7
    %v100 = vsub.s32 0, %v99
    %v101 = vrot.slane %v96, %v100
    %v105 = vunpack.c.l.b16 %v94
    %v106 = vunpack.c.l.b16 %v95
    %v107 = vpack.c.b16 %v106, %v105
    %vm109 = vcmask 130048
    %v111 = vsel %vm109, %v93, 0
    %113 = vmatprep.subr.bf16.mxu0 0
    %114 = vmatpush1.bf16.msra.mxu0 0
    %115 = vmatprep.subr.bf16.mxu0 0
    %116 = vmatpush1.bf16.msra.mxu0 0
    %117 = vmatprep.subr.bf16.mxu0 0
    %118 = vmatpush1.bf16.msra.mxu0 0
    %119 = vmatprep.subr.bf16.mxu0 0
    %120 = vmatpush1.bf16.msra.mxu0 0
    %121 = vmatprep.subr.bf16.mxu0 0
    %122 = vmatpush1.bf16.msra.mxu0 0
    %123 = vmatprep.subr.bf16.mxu0 0
    %124 = vmatpush1.bf16.msra.mxu0 0
    %125 = vmatprep.subr.bf16.mxu0 0
    %126 = vmatpush1.bf16.msra.mxu0 0
    %127 = vmatprep.subr.bf16.mxu0 0
    %128 = vmatpush1.bf16.msra.mxu0 %v107
    %129 = vmatprep.subr.bf16.mxu0 0
    %130 = vmatpush2.bf16.msra.mxu0 0
    %131 = vmatprep.subr.bf16.mxu0 0
    %132 = vmatpush2.bf16.msra.mxu0 0
    %133 = vmatprep.subr.bf16.mxu0 0
    %134 = vmatpush2.bf16.msra.mxu0 0
    %135 = vmatprep.subr.bf16.mxu0 0
    %136 = vmatpush2.bf16.msra.mxu0 0
    %137 = vmatprep.subr.bf16.mxu0 0
    %138 = vmatpush2.bf16.msra.mxu0 0
    %139 = vmatprep.subr.bf16.mxu0 0
    %140 = vmatpush2.bf16.msra.mxu0 0
    %141 = vmatprep.subr.bf16.mxu0 0
    %142 = vmatpush2.bf16.msra.mxu0 0
    %143 = vmatprep.subr.bf16.mxu0 0
    %144 = vmatpush2.bf16.msra.mxu0 0
    %145 = vmatprep.mubr.bf16.mxu0 0
    %146 = vmatmul.mubr.bf16.gmra.mxu0 %v111
    %v147 = vpop.f32.mrf.mxu0
    %v148 = vadd.f32 %v101, %v147
    %v149 = vpop.f32.mrf.mxu0
    %v150 = vpop.f32.mrf.mxu0
    %v151 = vpop.f32.mrf.mxu0
    %152 = vdwg.mxu0
    %153 = vst [vmem:[#allocation2] sm:$0xff] %v148
    // Predicated region
    $region22: #{tpu_custom_call.1} parent=1 // pred_check
      _
    $region23: #{tpu_custom_call.1} parent=1 // pred_check_branch
      %155 = sbr.rel (0) target = $region25
    $region24: #{tpu_custom_call.1} parent=1 // pred_region
      %s157 = ssub.s32 128, 128
      %158 = vsyncadd [#allocation3], %s157
      %s160 = sshll.u32 [#allocation2], 4
      %s161 = int_to_ptr.vmem [resolvable:$true] %s160
      %163 = dma.vmem_to_hbm [thread:$0]  %s161, 128, %s5, [#allocation3]
    $region25: #{tpu_custom_call.1} parent=1 // pred_fallthru
      _
    // Predicated region
    $region26: #{tpu_custom_call.1} parent=1 // pred_check
      _
    $region27: #{tpu_custom_call.1} parent=1 // pred_check_branch
      %165 = sbr.rel (0) target = $region29
    $region28: #{tpu_custom_call.1} parent=1 // pred_region
      %166 = dma.done [#allocation3], 128
    $region29: #{tpu_custom_call.1} parent=1 // pred_fallthru
      _
    %167 = vsyncpa [#allocation3], 1

</llo_original>
